<compile_context>
chip_gen: v7x
topology: tpu7x:2x2x1
jax: 0.10.0
libtpu: 0.0.40
codegen_flags: <defaults>
</compile_context>

<pallas_src>
import math

import jax
import jax.numpy as jnp
from jax.experimental import pallas as pl
from jax.experimental.pallas import tpu as pltpu


def _round_up(a: int, b: int) -> int:
    return (a + b - 1) // b * b


def _cdiv(a: int, b: int) -> int:
    return (a + b - 1) // b


def _fourier_kernel(x_ref, e_ref, freq_ref, phase_ref, out_ref):
    # x_ref:     (TB, fan_in)        input rows (original dtype)
    # e_ref:     (fan_in, out_pad)   f32 0/1 one-hot lane-expansion matrix
    # freq_ref:  (1, out_pad)  f32   [f1,f1,f2,f2,...] per feature block, 0 in pad
    # phase_ref: (1, out_pad)  f32   [0,pi/2,0,pi/2,...] per feature block, 0 in pad
    # out_ref:   (TB, out_pad)       lane-dense output block (out_pad % 128 == 0)
    x = x_ref[...].astype(jnp.float32)
    e = e_ref[...]

    # Exact lane expansion on the MXU.  Every matmul operand value is exactly
    # bf16-representable (E is 0/1; x is split into bf16-exact pieces), so the
    # replicated result reconstructs x to ~f32 accuracy even if the MXU
    # internally truncates f32 operands to bf16.
    x_hi = x.astype(jnp.bfloat16).astype(jnp.float32)
    r = x - x_hi
    x_mid = r.astype(jnp.bfloat16).astype(jnp.float32)
    x_lo = r - x_mid
    xe = (jnp.dot(x_hi, e, preferred_element_type=jnp.float32)
          + jnp.dot(x_mid, e, preferred_element_type=jnp.float32)
          + jnp.dot(x_lo, e, preferred_element_type=jnp.float32))

    # VPU: t = x_f * freq_j  (+ pi/2 on odd lanes -> cos).  EUP: one dense sin.
    # Pad lanes have freq = phase = 0, so they store sin(0) == 0 for free.
    t = xe * freq_ref[...] + phase_ref[...]
    out_ref[...] = jnp.sin(t).astype(out_ref.dtype)


def make_frequencies(nff: int, freq_spacing: str = "logarithmic",
                     dtype=jnp.float32) -> jnp.ndarray:
    k = jnp.arange(1, nff + 1, dtype=dtype)
    if freq_spacing == "logarithmic":
        return (math.pi * (2.0 ** k)).astype(dtype)
    elif freq_spacing == "linear":
        return (2.0 * math.pi * k).astype(dtype)
    else:
        raise ValueError(f"Unknown frequency spacing paradigm: {freq_spacing}")


def _lane_constants(frequencies: jnp.ndarray, fan_in: int, two_nff: int,
                    out_pad: int):
    """Per-lane constant rows + one-hot expansion matrix (all f32)."""
    nff = two_nff // 2
    out_dim = fan_in * two_nff
    f32 = jnp.float32

    freq_block = jnp.repeat(frequencies.astype(f32), 2)                 # (2*nff,)
    phase_block = jnp.tile(jnp.array([0.0, 0.5 * math.pi], f32), nff)   # (2*nff,)
    freq_row = jnp.zeros((out_pad,), f32).at[:out_dim].set(jnp.tile(freq_block, fan_in))
    phase_row = jnp.zeros((out_pad,), f32).at[:out_dim].set(jnp.tile(phase_block, fan_in))
    # TODO(synk): frequency_bias (if enabled) folds in here:
    #   phase_row[f*2nff + 2j] += bias[j]; phase_row[f*2nff + 2j + 1] += bias[j].
    # trainable_frequencies changes nothing in the forward math.

    col_feat = jnp.arange(out_pad) // two_nff                           # lane -> feature
    e = (col_feat[None, :] == jnp.arange(fan_in)[:, None]).astype(f32)  # (fan_in, out_pad)
    return e, freq_row.reshape(1, out_pad), phase_row.reshape(1, out_pad)


def fourier_layer(x: jnp.ndarray, frequencies: jnp.ndarray, *,
                  block_rows: int = 1024,
                  vmem_budget_bytes: int = 16 * 1024 * 1024) -> jnp.ndarray:
    """Pallas implementation of FourierLayer.forward (no frequency bias)."""
    fan_in = x.shape[-1]
    nff = int(frequencies.shape[0])
    two_nff = 2 * nff
    out_dim = fan_in * two_nff
    out_pad = _round_up(out_dim, 128)            # lane-dense HBM stores
    lead = x.shape[:-1]
    rows = math.prod(lead) if lead else 1
    dtype = x.dtype
    isz = jnp.dtype(dtype).itemsize

    rows8 = _round_up(rows, 8)                   # pad rows to sublane multiple only

    # Row tile from a VMEM budget: double-buffered input+output blocks plus
    # the (also double-buffered) resident constants.  No staging buffer.
    const_bytes = 2 * (fan_in + 2) * out_pad * 4
    bytes_per_row = 2 * (fan_in * isz + out_pad * isz)
    budget = max(vmem_budget_bytes - const_bytes, 1 << 16)
    br = max(8, min(block_rows, budget // bytes_per_row) // 8 * 8)
    br = min(br, rows8)

    n_steps = _cdiv(rows8, br)
    if n_steps == 1 and rows8 >= 1024:
        n_steps = 2                              # give megacore (v7x) >= 2 parallel steps
    br = _round_up(_cdiv(rows8, n_steps), 8)     # rebalance: waste < 8 rows per step
    rows_pad = n_steps * br

    x2 = x.reshape(rows, fan_in)
    if rows_pad != rows:
        x2 = jnp.pad(x2, ((0, rows_pad - rows), (0, 0)))

    e, freq_row, phase_row = _lane_constants(frequencies, fan_in, two_nff, out_pad)

    out = pl.pallas_call(
        _fourier_kernel,
        out_shape=jax.ShapeDtypeStruct((rows_pad, out_pad), dtype),
        grid_spec=pltpu.PrefetchScalarGridSpec(
            num_scalar_prefetch=0,
            grid=(n_steps,),
            in_specs=[
                pl.BlockSpec((br, fan_in), lambda i: (i, 0)),
                pl.BlockSpec((fan_in, out_pad), lambda i: (0, 0)),   # resident constants
                pl.BlockSpec((1, out_pad), lambda i: (0, 0)),
                pl.BlockSpec((1, out_pad), lambda i: (0, 0)),
            ],
            out_specs=pl.BlockSpec((br, out_pad), lambda i: (i, 0)),
        ),
        compiler_params=pltpu.CompilerParams(
            dimension_semantics=("parallel",),
            vmem_limit_bytes=32 * 1024 * 1024,
        ),
        cost_estimate=pl.CostEstimate(
            flops=rows_pad * out_pad * (6 * fan_in + 2),
            transcendentals=rows_pad * out_pad,
            bytes_accessed=rows_pad * (fan_in + out_pad) * isz,
        ),
    )(x2, e, freq_row, phase_row)

    if rows_pad != rows or out_pad != out_dim:
        out = out[:rows, :out_dim]
    return out.reshape(lead + (out_dim,))


def fourier_layer_ref(x: jnp.ndarray, frequencies: jnp.ndarray) -> jnp.ndarray:
    """Pure-JAX reference mirroring the PyTorch forward exactly."""
    fin = x[..., None] * frequencies                                   # (..., fan_in, nff)
    s = jnp.sin(fin)
    c = jnp.cos(fin)
    out = jnp.concatenate([s[..., None], c[..., None]], axis=-1)       # (..., fan_in, nff, 2)
    return out.reshape(x.shape[:-1] + (-1,))


if __name__ == "__main__":
    # FourierLayer(fan_in=8, n_fourier_features=8, freq_spacing='logarithmic',
    #              trainable_frequencies=False, frequency_bias=False)
    fan_in = 8
    nff = 8
    frequencies = make_frequencies(nff, "logarithmic")

    key = jax.random.PRNGKey(0)
    # small input: batch=2, spatial=16, fan_in=8  ->  output (2, 16, 128)
    x = jax.random.normal(key, (2, 16, fan_in), dtype=jnp.float32)

    out = jax.block_until_ready(fourier_layer(x, frequencies))
    ref = jax.block_until_ready(fourier_layer_ref(x, frequencies))
    assert out.shape == ref.shape == (2, 16, 2 * fan_in * nff)
    max_err = float(jnp.max(jnp.abs(out - ref)))
    assert max_err < 1e-2, f"max abs err too large: {max_err}"

    # Second shape: leading dims whose product (15) is not a multiple of 8 --
    # exercises the wrapper-side row-padding + post-slice path.
    x_b = jax.random.normal(jax.random.PRNGKey(1), (3, 5, fan_in), dtype=jnp.float32)
    out_b = jax.block_until_ready(fourier_layer(x_b, frequencies))
    ref_b = fourier_layer_ref(x_b, frequencies)
    max_err_b = float(jnp.max(jnp.abs(out_b - ref_b)))
    assert max_err_b < 1e-2, f"max abs err too large (padded rows): {max_err_b}"

    print("KERNEL_OK")
</pallas_src>

<mosaic_0001>
module attributes {stable_mosaic.version = 11 : i64} {
  func.func @_fourier_kernel(%arg0: i32, %arg1: memref<32x8xf32, #tpu.memory_space<vmem>>, %arg2: memref<8x128xf32, #tpu.memory_space<vmem>>, %arg3: memref<1x128xf32, #tpu.memory_space<vmem>>, %arg4: memref<1x128xf32, #tpu.memory_space<vmem>>, %arg5: memref<32x128xf32, #tpu.memory_space<vmem>>) attributes {dimension_semantics = [#tpu.dimension_semantics<parallel>], iteration_bounds = array<i64: 1>, scalar_prefetch = 0 : i64, scratch_operands = 0 : i64, tpu.core_type = #tpu.core_type<tc>, window_params = [{transform_indices = @transform_0, window_bounds = array<i64: 32, 8>}, {pipeline_mode = #tpu.pipeline_mode<synchronous>, transform_indices = @transform_1, window_bounds = array<i64: 8, 128>}, {pipeline_mode = #tpu.pipeline_mode<synchronous>, transform_indices = @transform_2, window_bounds = array<i64: 1, 128>}, {pipeline_mode = #tpu.pipeline_mode<synchronous>, transform_indices = @transform_3, window_bounds = array<i64: 1, 128>}, {transform_indices = @transform_4, window_bounds = array<i64: 32, 128>}]} {
    %c0 = arith.constant 0 : index
    %c0_0 = arith.constant 0 : index
    %0 = vector.load %arg1[%c0, %c0_0] : memref<32x8xf32, #tpu.memory_space<vmem>>, vector<32x8xf32>
    %c0_1 = arith.constant 0 : index
    %c0_2 = arith.constant 0 : index
    %1 = vector.load %arg2[%c0_1, %c0_2] : memref<8x128xf32, #tpu.memory_space<vmem>>, vector<8x128xf32>
    %2 = arith.truncf %0 : vector<32x8xf32> to vector<32x8xbf16>
    %3 = arith.extf %2 : vector<32x8xbf16> to vector<32x8xf32>
    %4 = arith.subf %0, %3 : vector<32x8xf32>
    %5 = arith.truncf %4 : vector<32x8xf32> to vector<32x8xbf16>
    %6 = arith.extf %5 : vector<32x8xbf16> to vector<32x8xf32>
    %7 = arith.subf %4, %6 : vector<32x8xf32>
    %cst = arith.constant dense<0.000000e+00> : vector<32x128xf32>
    %8 = tpu.matmul %3, %1, %cst {dimension_numbers = #tpu.dot_dimension_numbers<[1], [0], [0], [1], [0, 0, 1, 1], [], []>} : vector<32x8xf32>, vector<8x128xf32>, vector<32x128xf32> -> vector<32x128xf32>
    %cst_3 = arith.constant dense<0.000000e+00> : vector<32x128xf32>
    %9 = tpu.matmul %6, %1, %cst_3 {dimension_numbers = #tpu.dot_dimension_numbers<[1], [0], [0], [1], [0, 0, 1, 1], [], []>} : vector<32x8xf32>, vector<8x128xf32>, vector<32x128xf32> -> vector<32x128xf32>
    %10 = arith.addf %8, %9 : vector<32x128xf32>
    %cst_4 = arith.constant dense<0.000000e+00> : vector<32x128xf32>
    %11 = tpu.matmul %7, %1, %cst_4 {dimension_numbers = #tpu.dot_dimension_numbers<[1], [0], [0], [1], [0, 0, 1, 1], [], []>} : vector<32x8xf32>, vector<8x128xf32>, vector<32x128xf32> -> vector<32x128xf32>
    %12 = arith.addf %10, %11 : vector<32x128xf32>
    %c0_5 = arith.constant 0 : index
    %c0_6 = arith.constant 0 : index
    %13 = vector.load %arg3[%c0_5, %c0_6] : memref<1x128xf32, #tpu.memory_space<vmem>>, vector<1x128xf32>
    %14 = vector.broadcast %13 : vector<1x128xf32> to vector<32x128xf32>
    %15 = arith.mulf %12, %14 : vector<32x128xf32>
    %c0_7 = arith.constant 0 : index
    %c0_8 = arith.constant 0 : index
    %16 = vector.load %arg4[%c0_7, %c0_8] : memref<1x128xf32, #tpu.memory_space<vmem>>, vector<1x128xf32>
    %17 = vector.broadcast %16 : vector<1x128xf32> to vector<32x128xf32>
    %18 = arith.addf %15, %17 : vector<32x128xf32>
    %19 = math.sin %18 : vector<32x128xf32>
    %c0_9 = arith.constant 0 : index
    %c0_10 = arith.constant 0 : index
    %20 = vector.load %arg5[%c0_9, %c0_10] : memref<32x128xf32, #tpu.memory_space<vmem>>, vector<32x128xf32>
    tpu.vector_store %arg5[%c0_9, %c0_10], %19 {strides = array<i32>} : memref<32x128xf32, #tpu.memory_space<vmem>>, vector<32x128xf32>,
    return
  }
  func.func @transform_0(%arg0: i32) -> (i32, i32) {
    %c0_i32 = arith.constant 0 : i32
    %c0_i32_0 = arith.constant 0 : i32
    return %arg0, %c0_i32 : i32, i32
  }
  func.func @transform_1(%arg0: i32) -> (i32, i32) {
    %c0_i32 = arith.constant 0 : i32
    %c0_i32_0 = arith.constant 0 : i32
    %c0_i32_1 = arith.constant 0 : i32
    return %c0_i32, %c0_i32_0 : i32, i32
  }
  func.func @transform_2(%arg0: i32) -> (i32, i32) {
    %c0_i32 = arith.constant 0 : i32
    %c0_i32_0 = arith.constant 0 : i32
    %c0_i32_1 = arith.constant 0 : i32
    return %c0_i32, %c0_i32_0 : i32, i32
  }
  func.func @transform_3(%arg0: i32) -> (i32, i32) {
    %c0_i32 = arith.constant 0 : i32
    %c0_i32_0 = arith.constant 0 : i32
    %c0_i32_1 = arith.constant 0 : i32
    return %c0_i32, %c0_i32_0 : i32, i32
  }
  func.func @transform_4(%arg0: i32) -> (i32, i32) {
    %c0_i32 = arith.constant 0 : i32
    %c0_i32_0 = arith.constant 0 : i32
    return %arg0, %c0_i32 : i32, i32
  }
}

</mosaic_0001>

<llo_original>
// kernel: tpu_custom_call.1
$region0: #{tpu_custom_call.1}
  #allocation0 [shape = 'u32[]', space=smem, size = 0x4, offset = 0x4, fixed_abs, tag = 'smem constant byte address 0x4 - core index']
  #allocation1 [shape = 'u32[144,128]{1,0:T(1,128)}', space=vmem, size = 0x12000, scoped, tag = 'internal scratch']
  %s0 = inlined_call_operand.vmem [shape: f32[32,8], index: 0, kind: input, shape index: {}]
  %s1 = inlined_call_operand.vmem [shape: f32[8,128], index: 1, kind: input, shape index: {}]
  %s2 = inlined_call_operand.vmem [shape: f32[1,128], index: 2, kind: input, shape index: {}]
  %s3 = inlined_call_operand.vmem [shape: f32[1,128], index: 3, kind: input, shape index: {}]
  %s4 = inlined_call_operand.hbm [shape: f32[32,128], index: 4, kind: output, shape index: {}]
  %s5 = sld [smem:[#allocation0]]
  $region26: #{tpu_custom_call.1} parent=0
    _
  %s7 = ssub.s32 1, %s5
  %s8 = scalar_select 0, %s7, %s5
  $region1: #{tpu_custom_call.1} parent=0
    #allocation2 [shape = 'u8[16384]{0}', space=vmem, size = 0x4000, scoped, tag = 'output window, operand 0, single buffered']
    #allocation3 [shape = 's32[1]{0}', space=sflag, size = 0x4, scoped, tag = 'scoped memory for tpu_custom_call.1']
    %9 = vsyncpa [#allocation3], 0
    // Predicated region
    $region2: #{tpu_custom_call.1} parent=1 // pred_check
      _
    $region3: #{tpu_custom_call.1} parent=1 // pred_check_branch
      %11 = sbr.rel (0) target = $region5
    $region4: #{tpu_custom_call.1} parent=1 // pred_region
      _
    $region5: #{tpu_custom_call.1} parent=1 // pred_fallthru
      _
    // Predicated region
    $region6: #{tpu_custom_call.1} parent=1 // pred_check
      _
    $region7: #{tpu_custom_call.1} parent=1 // pred_check_branch
      %13 = sbr.rel (0) target = $region9
    $region8: #{tpu_custom_call.1} parent=1 // pred_region
      _
    $region9: #{tpu_custom_call.1} parent=1 // pred_fallthru
      _
    // Predicated region
    $region10: #{tpu_custom_call.1} parent=1 // pred_check
      _
    $region11: #{tpu_custom_call.1} parent=1 // pred_check_branch
      %15 = sbr.rel (0) target = $region13
    $region12: #{tpu_custom_call.1} parent=1 // pred_region
      _
    $region13: #{tpu_custom_call.1} parent=1 // pred_fallthru
      _
    // Predicated region
    $region14: #{tpu_custom_call.1} parent=1 // pred_check
      _
    $region15: #{tpu_custom_call.1} parent=1 // pred_check_branch
      %17 = sbr.rel (0) target = $region17
    $region16: #{tpu_custom_call.1} parent=1 // pred_region
      _
    $region17: #{tpu_custom_call.1} parent=1 // pred_fallthru
      _
    %v18 = vld [vmem:[%s0] sm:$0xff]
    %v19 = vld [vmem:[%s0 + $0x8] sm:$0xff]
    %v20 = vld [vmem:[%s0 + $0x10] sm:$0xff]
    %v21 = vld [vmem:[%s0 + $0x18] sm:$0xff]
    %v22 = vld [vmem:[%s1] sm:$0xff]
    %v23 = vpack.c.bf16 %v19, %v18
    %v24 = vpack.c.bf16 %v21, %v20
    %v25 = vunpack.c.l.bf16 %v23
    %v26 = vunpack.c.h.bf16 %v23
    %v27 = vunpack.c.l.bf16 %v24
    %v28 = vunpack.c.h.bf16 %v24
    %v29 = vsub.f32 %v18, %v25
    %v30 = vsub.f32 %v19, %v26
    %v31 = vsub.f32 %v20, %v27
    %v32 = vsub.f32 %v21, %v28
    %v33 = vpack.c.bf16 %v30, %v29
    %v34 = vpack.c.bf16 %v32, %v31
    %v35 = vunpack.c.l.bf16 %v33
    %v36 = vunpack.c.h.bf16 %v33
    %v37 = vunpack.c.l.bf16 %v34
    %v38 = vunpack.c.h.bf16 %v34
    %v39 = vsub.f32 %v29, %v35
    %v40 = vsub.f32 %v30, %v36
    %v41 = vsub.f32 %v31, %v37
    %v42 = vsub.f32 %v32, %v38
    %vm43 = vcmask 64512
    %v45 = vsel %vm43, %v35, 0
    %v48 = vsel %vm43, %v36, 0
    %v51 = vsel %vm43, %v37, 0
    %v54 = vsel %vm43, %v38, 0
    %56 = vmatprep.subr.mxu0 0.0
    %57 = vmatpush1.msra.mxu0 %v22
    %58 = vmatprep.subr.mxu0 0.0
    %59 = vmatpush1.msra.mxu0 0.0
    %60 = vmatprep.subr.mxu0 0.0
    %61 = vmatpush1.msra.mxu0 0.0
    %62 = vmatprep.subr.mxu0 0.0
    %63 = vmatpush1.msra.mxu0 0.0
    %64 = vmatprep.subr.mxu0 0.0
    %65 = vmatpush1.msra.mxu0 0.0
    %66 = vmatprep.subr.mxu0 0.0
    %67 = vmatpush1.msra.mxu0 0.0
    %68 = vmatprep.subr.mxu0 0.0
    %69 = vmatpush1.msra.mxu0 0.0
    %70 = vmatprep.subr.mxu0 0.0
    %71 = vmatpush1.msra.mxu0 0.0
    %72 = vmatprep.subr.mxu0 0.0
    %73 = vmatpush1.msra.mxu0 0.0
    %74 = vmatprep.subr.mxu0 0.0
    %75 = vmatpush1.msra.mxu0 0.0
    %76 = vmatprep.subr.mxu0 0.0
    %77 = vmatpush1.msra.mxu0 0.0
    %78 = vmatprep.subr.mxu0 0.0
    %79 = vmatpush1.msra.mxu0 0.0
    %80 = vmatprep.subr.mxu0 0.0
    %81 = vmatpush1.msra.mxu0 0.0
    %82 = vmatprep.subr.mxu0 0.0
    %83 = vmatpush1.msra.mxu0 0.0
    %84 = vmatprep.subr.mxu0 0.0
    %85 = vmatpush1.msra.mxu0 0.0
    %86 = vmatprep.subr.mxu0 0.0
    %87 = vmatpush1.msra.mxu0 0.0
    %88 = vmatprep.subr.mxu0 0.0
    %89 = vmatpush1.msra.mxu0 0.0
    %90 = vmatprep.subr.mxu0 0.0
    %91 = vmatpush1.msra.mxu0 0.0
    %92 = vmatprep.subr.mxu0 0.0
    %93 = vmatpush1.msra.mxu0 0.0
    %94 = vmatprep.subr.mxu0 0.0
    %95 = vmatpush1.msra.mxu0 0.0
    %96 = vmatprep.subr.mxu0 0.0
    %97 = vmatpush1.msra.mxu0 0.0
    %98 = vmatprep.subr.mxu0 0.0
    %99 = vmatpush1.msra.mxu0 0.0
    %100 = vmatprep.subr.mxu0 0.0
    %101 = vmatpush1.msra.mxu0 0.0
    %102 = vmatprep.subr.mxu0 0.0
    %103 = vmatpush1.msra.mxu0 0.0
    %104 = vmatprep.subr.mxu0 0.0
    %105 = vmatpush1.msra.mxu0 0.0
    %106 = vmatprep.subr.mxu0 0.0
    %107 = vmatpush1.msra.mxu0 0.0
    %108 = vmatprep.subr.mxu0 0.0
    %109 = vmatpush1.msra.mxu0 0.0
    %110 = vmatprep.subr.mxu0 0.0
    %111 = vmatpush1.msra.mxu0 0.0
    %112 = vmatprep.subr.mxu0 0.0
    %113 = vmatpush1.msra.mxu0 0.0
    %114 = vmatprep.subr.mxu0 0.0
    %115 = vmatpush1.msra.mxu0 0.0
    %116 = vmatprep.subr.mxu0 0.0
    %117 = vmatpush1.msra.mxu0 0.0
    %118 = vmatprep.subr.mxu0 0.0
    %119 = vmatpush1.msra.mxu0 0.0
    %120 = vmatprep.mubr.f32.mxu0 0.0
    %121 = vmatmul.mubr.f32.gmra.mrb[0].mxu0 %v45
    %v122 = vpop.f32.mrb[0].mxu0
    %v123 = vadd.f32 0.0, %v122
    %v124 = vpop.f32.mrb[0].mxu0
    %125 = vmatprep.mubr.f32.mxu0 0.0
    %126 = vmatmul.mubr.f32.gmra.mrb[0].mxu0 %v48
    %v127 = vpop.f32.mrb[0].mxu0
    %v128 = vadd.f32 0.0, %v127
    %v129 = vpop.f32.mrb[0].mxu0
    %130 = vmatprep.mubr.f32.mxu0 0.0
    %131 = vmatmul.mubr.f32.gmra.mrb[0].mxu0 %v51
    %v132 = vpop.f32.mrb[0].mxu0
    %v133 = vadd.f32 0.0, %v132
    %v134 = vpop.f32.mrb[0].mxu0
    %135 = vmatprep.mubr.f32.mxu0 0.0
    %136 = vmatmul.mubr.f32.gmra.mrb[0].mxu0 %v54
    %v137 = vpop.f32.mrb[0].mxu0
    %v138 = vadd.f32 0.0, %v137
    %v139 = vpop.f32.mrb[0].mxu0
    %140 = vdwg.mxu0
    %v142 = vsel %vm43, %v25, 0
    %v145 = vsel %vm43, %v26, 0
    %v148 = vsel %vm43, %v27, 0
    %v151 = vsel %vm43, %v28, 0
    %153 = vmatprep.subr.mxu0 0.0
    %154 = vmatpush1.msra.mxu0 %v22
    %155 = vmatprep.subr.mxu0 0.0
    %156 = vmatpush1.msra.mxu0 0.0
    %157 = vmatprep.subr.mxu0 0.0
    %158 = vmatpush1.msra.mxu0 0.0
    %159 = vmatprep.subr.mxu0 0.0
    %160 = vmatpush1.msra.mxu0 0.0
    %161 = vmatprep.subr.mxu0 0.0
    %162 = vmatpush1.msra.mxu0 0.0
    %163 = vmatprep.subr.mxu0 0.0
    %164 = vmatpush1.msra.mxu0 0.0
    %165 = vmatprep.subr.mxu0 0.0
    %166 = vmatpush1.msra.mxu0 0.0
    %167 = vmatprep.subr.mxu0 0.0
    %168 = vmatpush1.msra.mxu0 0.0
    %169 = vmatprep.subr.mxu0 0.0
    %170 = vmatpush1.msra.mxu0 0.0
    %171 = vmatprep.subr.mxu0 0.0
    %172 = vmatpush1.msra.mxu0 0.0
    %173 = vmatprep.subr.mxu0 0.0
    %174 = vmatpush1.msra.mxu0 0.0
    %175 = vmatprep.subr.mxu0 0.0
    %176 = vmatpush1.msra.mxu0 0.0
    %177 = vmatprep.subr.mxu0 0.0
    %178 = vmatpush1.msra.mxu0 0.0
    %179 = vmatprep.subr.mxu0 0.0
    %180 = vmatpush1.msra.mxu0 0.0
    %181 = vmatprep.subr.mxu0 0.0
    %182 = vmatpush1.msra.mxu0 0.0
    %183 = vmatprep.subr.mxu0 0.0
    %184 = vmatpush1.msra.mxu0 0.0
    %185 = vmatprep.subr.mxu0 0.0
    %186 = vmatpush1.msra.mxu0 0.0
    %187 = vmatprep.subr.mxu0 0.0
    %188 = vmatpush1.msra.mxu0 0.0
    %189 = vmatprep.subr.mxu0 0.0
    %190 = vmatpush1.msra.mxu0 0.0
    %191 = vmatprep.subr.mxu0 0.0
    %192 = vmatpush1.msra.mxu0 0.0
    %193 = vmatprep.subr.mxu0 0.0
    %194 = vmatpush1.msra.mxu0 0.0
    %195 = vmatprep.subr.mxu0 0.0
    %196 = vmatpush1.msra.mxu0 0.0
    %197 = vmatprep.subr.mxu0 0.0
    %198 = vmatpush1.msra.mxu0 0.0
    %199 = vmatprep.subr.mxu0 0.0
    %200 = vmatpush1.msra.mxu0 0.0
    %201 = vmatprep.subr.mxu0 0.0
    %202 = vmatpush1.msra.mxu0 0.0
    %203 = vmatprep.subr.mxu0 0.0
    %204 = vmatpush1.msra.mxu0 0.0
    %205 = vmatprep.subr.mxu0 0.0
    %206 = vmatpush1.msra.mxu0 0.0
    %207 = vmatprep.subr.mxu0 0.0
    %208 = vmatpush1.msra.mxu0 0.0
    %209 = vmatprep.subr.mxu0 0.0
    %210 = vmatpush1.msra.mxu0 0.0
    %211 = vmatprep.subr.mxu0 0.0
    %212 = vmatpush1.msra.mxu0 0.0
    %213 = vmatprep.subr.mxu0 0.0
    %214 = vmatpush1.msra.mxu0 0.0
    %215 = vmatprep.subr.mxu0 0.0
    %216 = vmatpush1.msra.mxu0 0.0
    %217 = vmatprep.mubr.f32.mxu0 0.0
    %218 = vmatmul.mubr.f32.gmra.mrb[0].mxu0 %v142
    %v219 = vpop.f32.mrb[0].mxu0
    %v220 = vadd.f32 %v123, %v219
    %v221 = vpop.f32.mrb[0].mxu0
    %222 = vmatprep.mubr.f32.mxu0 0.0
    %223 = vmatmul.mubr.f32.gmra.mrb[0].mxu0 %v145
    %v224 = vpop.f32.mrb[0].mxu0
    %v225 = vadd.f32 %v128, %v224
    %v226 = vpop.f32.mrb[0].mxu0
    %227 = vmatprep.mubr.f32.mxu0 0.0
    %228 = vmatmul.mubr.f32.gmra.mrb[0].mxu0 %v148
    %v229 = vpop.f32.mrb[0].mxu0
    %v230 = vadd.f32 %v133, %v229
    %v231 = vpop.f32.mrb[0].mxu0
    %232 = vmatprep.mubr.f32.mxu0 0.0
    %233 = vmatmul.mubr.f32.gmra.mrb[0].mxu0 %v151
    %v234 = vpop.f32.mrb[0].mxu0
    %v235 = vadd.f32 %v138, %v234
    %v236 = vpop.f32.mrb[0].mxu0
    %237 = vdwg.mxu0
    %v239 = vsel %vm43, %v39, 0
    %v242 = vsel %vm43, %v40, 0
    %v245 = vsel %vm43, %v41, 0
    %v248 = vsel %vm43, %v42, 0
    %250 = vmatprep.subr.mxu0 0.0
    %251 = vmatpush1.msra.mxu0 %v22
    %252 = vmatprep.subr.mxu0 0.0
    %253 = vmatpush1.msra.mxu0 0.0
    %254 = vmatprep.subr.mxu0 0.0
    %255 = vmatpush1.msra.mxu0 0.0
    %256 = vmatprep.subr.mxu0 0.0
    %257 = vmatpush1.msra.mxu0 0.0
    %258 = vmatprep.subr.mxu0 0.0
    %259 = vmatpush1.msra.mxu0 0.0
    %260 = vmatprep.subr.mxu0 0.0
    %261 = vmatpush1.msra.mxu0 0.0
    %262 = vmatprep.subr.mxu0 0.0
    %263 = vmatpush1.msra.mxu0 0.0
    %264 = vmatprep.subr.mxu0 0.0
    %265 = vmatpush1.msra.mxu0 0.0
    %266 = vmatprep.subr.mxu0 0.0
    %267 = vmatpush1.msra.mxu0 0.0
    %268 = vmatprep.subr.mxu0 0.0
    %269 = vmatpush1.msra.mxu0 0.0
    %270 = vmatprep.subr.mxu0 0.0
    %271 = vmatpush1.msra.mxu0 0.0
    %272 = vmatprep.subr.mxu0 0.0
    %273 = vmatpush1.msra.mxu0 0.0
    %274 = vmatprep.subr.mxu0 0.0
    %275 = vmatpush1.msra.mxu0 0.0
    %276 = vmatprep.subr.mxu0 0.0
    %277 = vmatpush1.msra.mxu0 0.0
    %278 = vmatprep.subr.mxu0 0.0
    %279 = vmatpush1.msra.mxu0 0.0
    %280 = vmatprep.subr.mxu0 0.0
    %281 = vmatpush1.msra.mxu0 0.0
    %282 = vmatprep.subr.mxu0 0.0
    %283 = vmatpush1.msra.mxu0 0.0
    %284 = vmatprep.subr.mxu0 0.0
    %285 = vmatpush1.msra.mxu0 0.0
    %286 = vmatprep.subr.mxu0 0.0
    %287 = vmatpush1.msra.mxu0 0.0
    %288 = vmatprep.subr.mxu0 0.0
    %289 = vmatpush1.msra.mxu0 0.0
    %290 = vmatprep.subr.mxu0 0.0
    %291 = vmatpush1.msra.mxu0 0.0
    %292 = vmatprep.subr.mxu0 0.0
    %293 = vmatpush1.msra.mxu0 0.0
    %294 = vmatprep.subr.mxu0 0.0
    %295 = vmatpush1.msra.mxu0 0.0
    %296 = vmatprep.subr.mxu0 0.0
    %297 = vmatpush1.msra.mxu0 0.0
    %298 = vmatprep.subr.mxu0 0.0
    %299 = vmatpush1.msra.mxu0 0.0
    %300 = vmatprep.subr.mxu0 0.0
    %301 = vmatpush1.msra.mxu0 0.0
    %302 = vmatprep.subr.mxu0 0.0
    %303 = vmatpush1.msra.mxu0 0.0
    %304 = vmatprep.subr.mxu0 0.0
    %305 = vmatpush1.msra.mxu0 0.0
    %306 = vmatprep.subr.mxu0 0.0
    %307 = vmatpush1.msra.mxu0 0.0
    %308 = vmatprep.subr.mxu0 0.0
    %309 = vmatpush1.msra.mxu0 0.0
    %310 = vmatprep.subr.mxu0 0.0
    %311 = vmatpush1.msra.mxu0 0.0
    %312 = vmatprep.subr.mxu0 0.0
    %313 = vmatpush1.msra.mxu0 0.0
    %314 = vmatprep.mubr.f32.mxu0 0.0
    %315 = vmatmul.mubr.f32.gmra.mrb[0].mxu0 %v239
    %v316 = vpop.f32.mrb[0].mxu0
    %v317 = vadd.f32 0.0, %v316
    %v318 = vpop.f32.mrb[0].mxu0
    %319 = vmatprep.mubr.f32.mxu0 0.0
    %320 = vmatmul.mubr.f32.gmra.mrb[0].mxu0 %v242
    %v321 = vpop.f32.mrb[0].mxu0
    %v322 = vadd.f32 0.0, %v321
    %v323 = vpop.f32.mrb[0].mxu0
    %324 = vmatprep.mubr.f32.mxu0 0.0
    %325 = vmatmul.mubr.f32.gmra.mrb[0].mxu0 %v245
    %v326 = vpop.f32.mrb[0].mxu0
    %v327 = vadd.f32 0.0, %v326
    %v328 = vpop.f32.mrb[0].mxu0
    %329 = vmatprep.mubr.f32.mxu0 0.0
    %330 = vmatmul.mubr.f32.gmra.mrb[0].mxu0 %v248
    %v331 = vpop.f32.mrb[0].mxu0
    %v332 = vadd.f32 0.0, %v331
    %v333 = vpop.f32.mrb[0].mxu0
    %334 = vdwg.mxu0
    %v335 = vadd.f32 %v220, %v317
    %v336 = vadd.f32 %v225, %v322
    %v337 = vadd.f32 %v230, %v327
    %v338 = vadd.f32 %v235, %v332
    %v339 = vld [vmem:[%s2] sm:$0x1]
    %v341 = vlaneseq
    %v342 = vshrl.u32 %v341, 7
    %v343 = vsub.s32 0, %v342
    %v344 = vrot.slane %v339, %v343
    %v346 = vmul.f32 %v335, %v344
    %v347 = vmul.f32 %v336, %v344
    %v348 = vmul.f32 %v337, %v344
    %v349 = vmul.f32 %v338, %v344
    %v350 = vld [vmem:[%s3] sm:$0x1]
    %v352 = vlaneseq
    %v353 = vshrl.u32 %v352, 7
    %v354 = vsub.s32 0, %v353
    %v355 = vrot.slane %v350, %v354
    %v357 = vadd.f32 %v346, %v355
    %v358 = vadd.f32 %v347, %v355
    %v359 = vadd.f32 %v348, %v355
    %v360 = vadd.f32 %v349, %v355
    %v361 = vand.u32 2147483647, %v357
    %vm362 = vcmp.le.f32.partialorder %v361, 0.7853982
    %vm363 = vcmp.lt.s32.totalorder %v357, 0
    %v364 = vand.u32 %v357, 2139095040
    %v365 = vshrl.u32 %v364, 23
    %v366 = vsub.s32 %v365, 127
    %v367 = vand.u32 2147483647, %v357
    %v368 = vand.u32 %v367, 8388607
    %v369 = vor.u32 %v368, 8388608
    %v370 = vsub.s32 0, %v369
    %v371 = vadd.s32 %v366, 1
    %vm372 = vcmp.gt.s32.totalorder %v371, 0
    %v373 = vsel %vm372, %v371, 0
    %v374 = vshrl.u32 %v373, 5
    %v375 = vand.u32 %v373, 31
    %v376 = vsub.s32 32, %v375
    %v377 = vshrl.u32 683565275, %v376
    %v378 = vshll.u32 683565275, %v375
    %v379 = vshrl.u32 2475754826, %v376
    %v380 = vor.u32 %v378, %v379
    %v381 = vshll.u32 2475754826, %v375
    %v382 = vshrl.u32 2131351028, %v376
    %v383 = vor.u32 %v381, %v382
    %v384 = vshll.u32 2131351028, %v375
    %v385 = vshrl.u32 2102212464, %v376
    %v386 = vor.u32 %v384, %v385
    %v387 = vshll.u32 2102212464, %v375
    %v388 = vshrl.u32 920167782, %v376
    %v389 = vor.u32 %v387, %v388
    %v390 = vshll.u32 920167782, %v375
    %v391 = vshrl.u32 1326507024, %v376
    %v392 = vor.u32 %v390, %v391
    %vm393 = vcmp.lt.s32.totalorder %v374, 1
    %vm394 = vcmp.lt.s32.totalorder %v374, 2
    %vm395 = vcmp.lt.s32.totalorder %v374, 3
    %vm396 = vcmp.lt.s32.totalorder %v374, 4
    %v397 = vsel %vm393, %v377, %v380
    %v398 = vsel %vm396, %v386, 2102212464
    %v399 = vsel %vm395, %v383, %v398
    %v400 = vsel %vm394, %v397, %v399
    %v401 = vsel %vm393, %v380, %v383
    %v402 = vsel %vm396, %v389, 920167782
    %v403 = vsel %vm395, %v386, %v402
    %v404 = vsel %vm394, %v401, %v403
    %v405 = vsel %vm393, %v383, %v386
    %v406 = vsel %vm396, %v392, 1326507024
    %v407 = vsel %vm395, %v389, %v406
    %v408 = vsel %vm394, %v405, %v407
    %v409 = vshll.u32 %v369, 8
    %v410 = vmul.u32.u64.compose %v409, %v408
    %v411 = vextract.low.u32 %v410
    %v412 = vextract.high.u32 %v410
    %v413 = vmul.u32.u64.compose %v409, %v404
    %v414 = vextract.low.u32 %v413
    %v415 = vextract.high.u32 %v413
    %v416 = vmul.u32 %v409, %v400
    %v417 = vadd.s32 %v412, %v414
    %vm418 = vc.u32 %v412, %v414
    %v419 = vadd.s32 %v415, 1
    %v420 = vsel %vm418, %v419, %v415
    %v421 = vadd.s32 %v416, %v420
    %v422 = vadd.s32 %v421, 536870912
    %v423 = vshrl.u32 %v422, 30
    %v424 = vshll.u32 %v423, 30
    %v425 = vsub.s32 %v421, %v424
    %vm426 = vcmp.lt.s32.totalorder %v425, 0
    %v427 = vsub.s32 0, %v425
    %v428 = vsel %vm426, %v427, %v425
    %v429 = vclz %v428
    %v430 = vsub.s32 %v429, 2
    %vm431 = vcmp.gt.s32.totalorder 0, %v430
    %v432 = vsel %vm431, 0, %v430
    %v433 = vsub.s32 32, %v432
    %v434 = vshll.u32 %v425, %v432
    %v435 = vshrl.u32 %v417, %v433
    %v436 = vor.u32 %v434, %v435
    %v437 = vsub.s32 4294967266, %v432
    %v438 = vadd.s32 %v437, 127
    %v439 = vshll.u32 %v438, 23
    %v440 = vor.u32 4788187, %v439
    %v441 = vand.u32 2147483647, %v440
    %v443 = vcvt.s32.f32 %v436
    %v444 = vmul.f32 %v443, %v441
    %v445 = vxor.u32 %v444, 2147483648
    %v446 = vsel %vm363, %v445, %v444
    %v447 = vsub.s32 4, %v423
    %v448 = vsel %vm363, %v447, %v423
    %v449 = vsel %vm362, %v357, %v446
    %v450 = vsel %vm362, 0, %v448
    %v451 = vcosq.f32.pop %v449
    %v452 = vsinq.f32.pop %v449
    %vm453 = vweird.f32 %v357
    %v454 = vadd.s32 %v450, 3
    %v455 = vand.u32 %v454, 3
    %vm456 = vcmp.lt.s32.totalorder %v455, 2
    %vm457 = vcmp.eq.s32.totalorder %v455, 0
    %v458 = vxor.u32 %v452, 2147483648
    %v459 = vsel %vm457, %v451, %v458
    %vm460 = vcmp.eq.s32.totalorder %v455, 2
    %v461 = vxor.u32 %v451, 2147483648
    %v462 = vsel %vm460, %v461, %v452
    %v463 = vsel %vm456, %v459, %v462
    %v464 = vsel %vm453, nan, %v463
    %v465 = vand.u32 2147483647, %v358
    %vm466 = vcmp.le.f32.partialorder %v465, 0.7853982
    %vm467 = vcmp.lt.s32.totalorder %v358, 0
    %v468 = vand.u32 %v358, 2139095040
    %v469 = vshrl.u32 %v468, 23
    %v470 = vsub.s32 %v469, 127
    %v471 = vand.u32 2147483647, %v358
    %v472 = vand.u32 %v471, 8388607
    %v473 = vor.u32 %v472, 8388608
    %v474 = vsub.s32 0, %v473
    %v475 = vadd.s32 %v470, 1
    %vm476 = vcmp.gt.s32.totalorder %v475, 0
    %v477 = vsel %vm476, %v475, 0
    %v478 = vshrl.u32 %v477, 5
    %v479 = vand.u32 %v477, 31
    %v480 = vsub.s32 32, %v479
    %v481 = vshrl.u32 683565275, %v480
    %v482 = vshll.u32 683565275, %v479
    %v483 = vshrl.u32 2475754826, %v480
    %v484 = vor.u32 %v482, %v483
    %v485 = vshll.u32 2475754826, %v479
    %v486 = vshrl.u32 2131351028, %v480
    %v487 = vor.u32 %v485, %v486
    %v488 = vshll.u32 2131351028, %v479
    %v489 = vshrl.u32 2102212464, %v480
    %v490 = vor.u32 %v488, %v489
    %v491 = vshll.u32 2102212464, %v479
    %v492 = vshrl.u32 920167782, %v480
    %v493 = vor.u32 %v491, %v492
    %v494 = vshll.u32 920167782, %v479
    %v495 = vshrl.u32 1326507024, %v480
    %v496 = vor.u32 %v494, %v495
    %vm497 = vcmp.lt.s32.totalorder %v478, 1
    %vm498 = vcmp.lt.s32.totalorder %v478, 2
    %vm499 = vcmp.lt.s32.totalorder %v478, 3
    %vm500 = vcmp.lt.s32.totalorder %v478, 4
    %v501 = vsel %vm497, %v481, %v484
    %v502 = vsel %vm500, %v490, 2102212464
    %v503 = vsel %vm499, %v487, %v502
    %v504 = vsel %vm498, %v501, %v503
    %v505 = vsel %vm497, %v484, %v487
    %v506 = vsel %vm500, %v493, 920167782
    %v507 = vsel %vm499, %v490, %v506
    %v508 = vsel %vm498, %v505, %v507
    %v509 = vsel %vm497, %v487, %v490
    %v510 = vsel %vm500, %v496, 1326507024
    %v511 = vsel %vm499, %v493, %v510
    %v512 = vsel %vm498, %v509, %v511
    %v513 = vshll.u32 %v473, 8
    %v514 = vmul.u32.u64.compose %v513, %v512
    %v515 = vextract.low.u32 %v514
    %v516 = vextract.high.u32 %v514
    %v517 = vmul.u32.u64.compose %v513, %v508
    %v518 = vextract.low.u32 %v517
    %v519 = vextract.high.u32 %v517
    %v520 = vmul.u32 %v513, %v504
    %v521 = vadd.s32 %v516, %v518
    %vm522 = vc.u32 %v516, %v518
    %v523 = vadd.s32 %v519, 1
    %v524 = vsel %vm522, %v523, %v519
    %v525 = vadd.s32 %v520, %v524
    %v526 = vadd.s32 %v525, 536870912
    %v527 = vshrl.u32 %v526, 30
    %v528 = vshll.u32 %v527, 30
    %v529 = vsub.s32 %v525, %v528
    %vm530 = vcmp.lt.s32.totalorder %v529, 0
    %v531 = vsub.s32 0, %v529
    %v532 = vsel %vm530, %v531, %v529
    %v533 = vclz %v532
    %v534 = vsub.s32 %v533, 2
    %vm535 = vcmp.gt.s32.totalorder 0, %v534
    %v536 = vsel %vm535, 0, %v534
    %v537 = vsub.s32 32, %v536
    %v538 = vshll.u32 %v529, %v536
    %v539 = vshrl.u32 %v521, %v537
    %v540 = vor.u32 %v538, %v539
    %v541 = vsub.s32 4294967266, %v536
    %v542 = vadd.s32 %v541, 127
    %v543 = vshll.u32 %v542, 23
    %v544 = vor.u32 4788187, %v543
    %v545 = vand.u32 2147483647, %v544
    %v547 = vcvt.s32.f32 %v540
    %v548 = vmul.f32 %v547, %v545
    %v549 = vxor.u32 %v548, 2147483648
    %v550 = vsel %vm467, %v549, %v548
    %v551 = vsub.s32 4, %v527
    %v552 = vsel %vm467, %v551, %v527
    %v553 = vsel %vm466, %v358, %v550
    %v554 = vsel %vm466, 0, %v552
    %v555 = vcosq.f32.pop %v553
    %v556 = vsinq.f32.pop %v553
    %vm557 = vweird.f32 %v358
    %v558 = vadd.s32 %v554, 3
    %v559 = vand.u32 %v558, 3
    %vm560 = vcmp.lt.s32.totalorder %v559, 2
    %vm561 = vcmp.eq.s32.totalorder %v559, 0
    %v562 = vxor.u32 %v556, 2147483648
    %v563 = vsel %vm561, %v555, %v562
    %vm564 = vcmp.eq.s32.totalorder %v559, 2
    %v565 = vxor.u32 %v555, 2147483648
    %v566 = vsel %vm564, %v565, %v556
    %v567 = vsel %vm560, %v563, %v566
    %v568 = vsel %vm557, nan, %v567
    %v569 = vand.u32 2147483647, %v359
    %vm570 = vcmp.le.f32.partialorder %v569, 0.7853982
    %vm571 = vcmp.lt.s32.totalorder %v359, 0
    %v572 = vand.u32 %v359, 2139095040
    %v573 = vshrl.u32 %v572, 23
    %v574 = vsub.s32 %v573, 127
    %v575 = vand.u32 2147483647, %v359
    %v576 = vand.u32 %v575, 8388607
    %v577 = vor.u32 %v576, 8388608
    %v578 = vsub.s32 0, %v577
    %v579 = vadd.s32 %v574, 1
    %vm580 = vcmp.gt.s32.totalorder %v579, 0
    %v581 = vsel %vm580, %v579, 0
    %v582 = vshrl.u32 %v581, 5
    %v583 = vand.u32 %v581, 31
    %v584 = vsub.s32 32, %v583
    %v585 = vshrl.u32 683565275, %v584
    %v586 = vshll.u32 683565275, %v583
    %v587 = vshrl.u32 2475754826, %v584
    %v588 = vor.u32 %v586, %v587
    %v589 = vshll.u32 2475754826, %v583
    %v590 = vshrl.u32 2131351028, %v584
    %v591 = vor.u32 %v589, %v590
    %v592 = vshll.u32 2131351028, %v583
    %v593 = vshrl.u32 2102212464, %v584
    %v594 = vor.u32 %v592, %v593
    %v595 = vshll.u32 2102212464, %v583
    %v596 = vshrl.u32 920167782, %v584
    %v597 = vor.u32 %v595, %v596
    %v598 = vshll.u32 920167782, %v583
    %v599 = vshrl.u32 1326507024, %v584
    %v600 = vor.u32 %v598, %v599
    %vm601 = vcmp.lt.s32.totalorder %v582, 1
    %vm602 = vcmp.lt.s32.totalorder %v582, 2
    %vm603 = vcmp.lt.s32.totalorder %v582, 3
    %vm604 = vcmp.lt.s32.totalorder %v582, 4
    %v605 = vsel %vm601, %v585, %v588
    %v606 = vsel %vm604, %v594, 2102212464
    %v607 = vsel %vm603, %v591, %v606
    %v608 = vsel %vm602, %v605, %v607
    %v609 = vsel %vm601, %v588, %v591
    %v610 = vsel %vm604, %v597, 920167782
    %v611 = vsel %vm603, %v594, %v610
    %v612 = vsel %vm602, %v609, %v611
    %v613 = vsel %vm601, %v591, %v594
    %v614 = vsel %vm604, %v600, 1326507024
    %v615 = vsel %vm603, %v597, %v614
    %v616 = vsel %vm602, %v613, %v615
    %v617 = vshll.u32 %v577, 8
    %v618 = vmul.u32.u64.compose %v617, %v616
    %v619 = vextract.low.u32 %v618
    %v620 = vextract.high.u32 %v618
    %v621 = vmul.u32.u64.compose %v617, %v612
    %v622 = vextract.low.u32 %v621
    %v623 = vextract.high.u32 %v621
    %v624 = vmul.u32 %v617, %v608
    %v625 = vadd.s32 %v620, %v622
    %vm626 = vc.u32 %v620, %v622
    %v627 = vadd.s32 %v623, 1
    %v628 = vsel %vm626, %v627, %v623
    %v629 = vadd.s32 %v624, %v628
    %v630 = vadd.s32 %v629, 536870912
    %v631 = vshrl.u32 %v630, 30
    %v632 = vshll.u32 %v631, 30
    %v633 = vsub.s32 %v629, %v632
    %vm634 = vcmp.lt.s32.totalorder %v633, 0
    %v635 = vsub.s32 0, %v633
    %v636 = vsel %vm634, %v635, %v633
    %v637 = vclz %v636
    %v638 = vsub.s32 %v637, 2
    %vm639 = vcmp.gt.s32.totalorder 0, %v638
    %v640 = vsel %vm639, 0, %v638
    %v641 = vsub.s32 32, %v640
    %v642 = vshll.u32 %v633, %v640
    %v643 = vshrl.u32 %v625, %v641
    %v644 = vor.u32 %v642, %v643
    %v645 = vsub.s32 4294967266, %v640
    %v646 = vadd.s32 %v645, 127
    %v647 = vshll.u32 %v646, 23
    %v648 = vor.u32 4788187, %v647
    %v649 = vand.u32 2147483647, %v648
    %v651 = vcvt.s32.f32 %v644
    %v652 = vmul.f32 %v651, %v649
    %v653 = vxor.u32 %v652, 2147483648
    %v654 = vsel %vm571, %v653, %v652
    %v655 = vsub.s32 4, %v631
    %v656 = vsel %vm571, %v655, %v631
    %v657 = vsel %vm570, %v359, %v654
    %v658 = vsel %vm570, 0, %v656
    %v659 = vcosq.f32.pop %v657
    %v660 = vsinq.f32.pop %v657
    %vm661 = vweird.f32 %v359
    %v662 = vadd.s32 %v658, 3
    %v663 = vand.u32 %v662, 3
    %vm664 = vcmp.lt.s32.totalorder %v663, 2
    %vm665 = vcmp.eq.s32.totalorder %v663, 0
    %v666 = vxor.u32 %v660, 2147483648
    %v667 = vsel %vm665, %v659, %v666
    %vm668 = vcmp.eq.s32.totalorder %v663, 2
    %v669 = vxor.u32 %v659, 2147483648
    %v670 = vsel %vm668, %v669, %v660
    %v671 = vsel %vm664, %v667, %v670
    %v672 = vsel %vm661, nan, %v671
    %v673 = vand.u32 2147483647, %v360
    %vm674 = vcmp.le.f32.partialorder %v673, 0.7853982
    %vm675 = vcmp.lt.s32.totalorder %v360, 0
    %v676 = vand.u32 %v360, 2139095040
    %v677 = vshrl.u32 %v676, 23
    %v678 = vsub.s32 %v677, 127
    %v679 = vand.u32 2147483647, %v360
    %v680 = vand.u32 %v679, 8388607
    %v681 = vor.u32 %v680, 8388608
    %v682 = vsub.s32 0, %v681
    %v683 = vadd.s32 %v678, 1
    %vm684 = vcmp.gt.s32.totalorder %v683, 0
    %v685 = vsel %vm684, %v683, 0
    %v686 = vshrl.u32 %v685, 5
    %v687 = vand.u32 %v685, 31
    %v688 = vsub.s32 32, %v687
    %v689 = vshrl.u32 683565275, %v688
    %v690 = vshll.u32 683565275, %v687
    %v691 = vshrl.u32 2475754826, %v688
    %v692 = vor.u32 %v690, %v691
    %v693 = vshll.u32 2475754826, %v687
    %v694 = vshrl.u32 2131351028, %v688
    %v695 = vor.u32 %v693, %v694
    %v696 = vshll.u32 2131351028, %v687
    %v697 = vshrl.u32 2102212464, %v688
    %v698 = vor.u32 %v696, %v697
    %v699 = vshll.u32 2102212464, %v687
    %v700 = vshrl.u32 920167782, %v688
    %v701 = vor.u32 %v699, %v700
    %v702 = vshll.u32 920167782, %v687
    %v703 = vshrl.u32 1326507024, %v688
    %v704 = vor.u32 %v702, %v703
    %vm705 = vcmp.lt.s32.totalorder %v686, 1
    %vm706 = vcmp.lt.s32.totalorder %v686, 2
    %vm707 = vcmp.lt.s32.totalorder %v686, 3
    %vm708 = vcmp.lt.s32.totalorder %v686, 4
    %v709 = vsel %vm705, %v689, %v692
    %v710 = vsel %vm708, %v698, 2102212464
    %v711 = vsel %vm707, %v695, %v710
    %v712 = vsel %vm706, %v709, %v711
    %v713 = vsel %vm705, %v692, %v695
    %v714 = vsel %vm708, %v701, 920167782
    %v715 = vsel %vm707, %v698, %v714
    %v716 = vsel %vm706, %v713, %v715
    %v717 = vsel %vm705, %v695, %v698
    %v718 = vsel %vm708, %v704, 1326507024
    %v719 = vsel %vm707, %v701, %v718
    %v720 = vsel %vm706, %v717, %v719
    %v721 = vshll.u32 %v681, 8
    %v722 = vmul.u32.u64.compose %v721, %v720
    %v723 = vextract.low.u32 %v722
    %v724 = vextract.high.u32 %v722
    %v725 = vmul.u32.u64.compose %v721, %v716
    %v726 = vextract.low.u32 %v725
    %v727 = vextract.high.u32 %v725
    %v728 = vmul.u32 %v721, %v712
    %v729 = vadd.s32 %v724, %v726
    %vm730 = vc.u32 %v724, %v726
    %v731 = vadd.s32 %v727, 1
    %v732 = vsel %vm730, %v731, %v727
    %v733 = vadd.s32 %v728, %v732
    %v734 = vadd.s32 %v733, 536870912
    %v735 = vshrl.u32 %v734, 30
    %v736 = vshll.u32 %v735, 30
    %v737 = vsub.s32 %v733, %v736
    %vm738 = vcmp.lt.s32.totalorder %v737, 0
    %v739 = vsub.s32 0, %v737
    %v740 = vsel %vm738, %v739, %v737
    %v741 = vclz %v740
    %v742 = vsub.s32 %v741, 2
    %vm743 = vcmp.gt.s32.totalorder 0, %v742
    %v744 = vsel %vm743, 0, %v742
    %v745 = vsub.s32 32, %v744
    %v746 = vshll.u32 %v737, %v744
    %v747 = vshrl.u32 %v729, %v745
    %v748 = vor.u32 %v746, %v747
    %v749 = vsub.s32 4294967266, %v744
    %v750 = vadd.s32 %v749, 127
    %v751 = vshll.u32 %v750, 23
    %v752 = vor.u32 4788187, %v751
    %v753 = vand.u32 2147483647, %v752
    %v755 = vcvt.s32.f32 %v748
    %v756 = vmul.f32 %v755, %v753
    %v757 = vxor.u32 %v756, 2147483648
    %v758 = vsel %vm675, %v757, %v756
    %v759 = vsub.s32 4, %v735
    %v760 = vsel %vm675, %v759, %v735
    %v761 = vsel %vm674, %v360, %v758
    %v762 = vsel %vm674, 0, %v760
    %v763 = vcosq.f32.pop %v761
    %v764 = vsinq.f32.pop %v761
    %vm765 = vweird.f32 %v360
    %v766 = vadd.s32 %v762, 3
    %v767 = vand.u32 %v766, 3
    %vm768 = vcmp.lt.s32.totalorder %v767, 2
    %vm769 = vcmp.eq.s32.totalorder %v767, 0
    %v770 = vxor.u32 %v764, 2147483648
    %v771 = vsel %vm769, %v763, %v770
    %vm772 = vcmp.eq.s32.totalorder %v767, 2
    %v773 = vxor.u32 %v763, 2147483648
    %v774 = vsel %vm772, %v773, %v764
    %v775 = vsel %vm768, %v771, %v774
    %v776 = vsel %vm765, nan, %v775
    %777 = vst [vmem:[#allocation2] sm:$0xff] %v464
    %778 = vst [vmem:[#allocation2 + $0x8] sm:$0xff] %v568
    %779 = vst [vmem:[#allocation2 + $0x10] sm:$0xff] %v672
    %780 = vst [vmem:[#allocation2 + $0x18] sm:$0xff] %v776
    // Predicated region
    $region18: #{tpu_custom_call.1} parent=1 // pred_check
      _
    $region19: #{tpu_custom_call.1} parent=1 // pred_check_branch
      %782 = sbr.rel (0) target = $region21
    $region20: #{tpu_custom_call.1} parent=1 // pred_region
      %s784 = ssub.s32 512, 512
      %785 = vsyncadd [#allocation3], %s784
      %s786 = sshll.u32 [#allocation2], 4
      %s787 = int_to_ptr.vmem [resolvable:$true] %s786
      %792 = dma.vmem_to_hbm [thread:$0]  %s787, 512, %s4, [#allocation3], 128, 128, 8
    $region21: #{tpu_custom_call.1} parent=1 // pred_fallthru
      _
    // Predicated region
    $region22: #{tpu_custom_call.1} parent=1 // pred_check
      _
    $region23: #{tpu_custom_call.1} parent=1 // pred_check_branch
      %794 = sbr.rel (0) target = $region25
    $region24: #{tpu_custom_call.1} parent=1 // pred_region
      %795 = dma.done [#allocation3], 512
    $region25: #{tpu_custom_call.1} parent=1 // pred_fallthru
      _
    %796 = vsyncpa [#allocation3], 1

</llo_original>
